<compile_context>
chip_gen: v6e
topology: v6e:2x2x1
jax: 0.10.0
libtpu: 0.0.40
codegen_flags: <defaults>
</compile_context>

<pallas_src>
import functools
from typing import NamedTuple, Optional

import jax
import jax.numpy as jnp
from jax import lax
from jax.experimental import pallas as pl
from jax.experimental.pallas import tpu as pltpu

_MIB = 1024 * 1024


def _round_up(x, m):
    return (x + m - 1) // m * m


def _tpu_generation():
    """Host-side TPU generation detection (Python/trace time only)."""
    try:
        kind = jax.devices()[0].device_kind.lower()
    except Exception:
        return "unknown"
    if "v5e" in kind or "v5 lite" in kind or "v5litepod" in kind:
        return "v5e"
    if "v6" in kind:
        return "v6e"
    if "v7" in kind:
        return "v7x"
    return "unknown"


def _tile_config(n, k, itemsize):
    """Per-generation MXU-bound tile sizes + scoped-VMEM budget.

    Arithmetic intensity ~ 2 / ((1/tm + 1/tn) * itemsize); per-generation
    targets: v6e ~680 flop/B, v7x ~340 flop/B, v5e ~256 flop/B.
    """
    gen = _tpu_generation()
    if gen == "v6e":
        tm, tn, tk = 1024, 2048, 1024
        vmem = 100 * _MIB          # 128 MiB physical; scoped default is 32 MiB
        if itemsize >= 4:          # f32 in/out: keep double-buffered tiles in budget
            tn = 1024
    elif gen == "v7x":
        tm, tn, tk = 512, 1024, 1024
        vmem = 48 * _MIB           # only 64 MiB physical per TensorCore
    elif gen == "v5e":
        tm, tn, tk = 512, 512, 1024
        vmem = 64 * _MIB           # 128 MiB physical; scoped default is 16 MiB
    else:
        tm, tn, tk = 512, 512, 1024
        vmem = 48 * _MIB           # conservative (could be a v7x-class part)
    # Clamp to the (128-aligned, lane-dense) problem size for small N / K.
    tn = min(tn, _round_up(n, 128))
    tk = min(tk, _round_up(k, 128))
    return gen, tm, tn, tk, vmem


class ProjectionParams(NamedTuple):
    w_kn: jax.Array                 # (K_pad, N_pad) transposed + padded weight
    b2d: jax.Array                  # (1, N_pad) padded bias
    n_out: int
    k_in: int
    gen: str
    tm_max: int
    tn: int
    tk: int
    vmem_limit: int
    compute_dtype: Optional[jnp.dtype]


def prepare_projection_params(weight, bias, *, compute_dtype=None,
                              tm=None, tn=None, tk=None):
    """One-time weight prep: transpose to (K, N), pad to tile multiples, cast.

    Hoists the per-call HBM pad/transpose of the (N, K) PyTorch weight out of
    the forward path so the kernel runs the MXU's plain (non-transposed-RHS)
    contraction with no per-tile XLU transpose.
    """
    n, k = weight.shape
    cdt = jnp.dtype(compute_dtype) if compute_dtype is not None else None
    itemsize = (cdt or weight.dtype).itemsize
    gen, tm_d, tn_d, tk_d, vmem = _tile_config(n, k, itemsize)
    tm = tm or tm_d
    tn = tn or tn_d
    tk = tk or tk_d

    n_p = _round_up(n, tn)
    k_p = _round_up(k, tk)

    w_kn = weight.T                          # (K, N), done once at init
    if cdt is not None:
        w_kn = w_kn.astype(cdt)
    if (k_p, n_p) != (k, n):
        w_kn = jnp.pad(w_kn, ((0, k_p - k), (0, n_p - n)))
    b = bias if n_p == n else jnp.pad(bias, (0, n_p - n))
    b2d = b.reshape(1, n_p)

    return ProjectionParams(w_kn=w_kn, b2d=b2d, n_out=n, k_in=k, gen=gen,
                            tm_max=tm, tn=tn, tk=tk, vmem_limit=vmem,
                            compute_dtype=cdt)


def _linear_kernel(x_ref, w_ref, b_ref, o_ref, acc_ref):
    # x_ref: (tm, tk)   w_ref: (tk, tn)   b_ref: (1, tn)
    # o_ref: (tm, tn)   acc_ref: (tm, tn) f32 scratch
    k = pl.program_id(2)

    part = jnp.dot(x_ref[...], w_ref[...], preferred_element_type=jnp.float32)

    @pl.when(k == 0)
    def _():
        acc_ref[...] = part          # write-first: no zero-init + RMW pass

    @pl.when(k > 0)
    def _():
        acc_ref[...] += part

    @pl.when(k == pl.num_programs(2) - 1)
    def _():
        o_ref[...] = (acc_ref[...] + b_ref[...].astype(jnp.float32)).astype(o_ref.dtype)


@functools.partial(
    jax.jit,
    static_argnames=("n_out", "tm", "tn", "tk", "vmem_limit", "out_dtype"))
def _projection_call(x2d, w_kn, b2d, *, n_out, tm, tn, tk, vmem_limit, out_dtype):
    m, k = x2d.shape
    k_p, n_p = w_kn.shape

    mp = _round_up(m, tm)
    if (mp, k_p) != (m, k):
        # Only the (cheap, M-sized) activation pad remains on the hot path;
        # the weight pad/transpose happened once at prepare time.
        x2d = jnp.pad(x2d, ((0, mp - m), (0, k_p - k)))

    grid = (mp // tm, n_p // tn, k_p // tk)

    bytes_accessed = (
        grid[1] * mp * k_p * x2d.dtype.itemsize       # x re-read per N block
        + grid[0] * n_p * k_p * w_kn.dtype.itemsize   # w re-read per M block
        + mp * n_p * jnp.dtype(out_dtype).itemsize    # output written once
        + n_p * b2d.dtype.itemsize)

    out = pl.pallas_call(
        _linear_kernel,
        out_shape=jax.ShapeDtypeStruct((mp, n_p), out_dtype),
        grid_spec=pltpu.PrefetchScalarGridSpec(
            num_scalar_prefetch=0,
            grid=grid,
            in_specs=[
                pl.BlockSpec((tm, tk), lambda i, j, kk: (i, kk)),   # activations
                pl.BlockSpec((tk, tn), lambda i, j, kk: (kk, j)),   # weight (K, N)
                pl.BlockSpec((1, tn), lambda i, j, kk: (0, j)),     # bias
            ],
            out_specs=pl.BlockSpec((tm, tn), lambda i, j, kk: (i, j)),
            scratch_shapes=[pltpu.VMEM((tm, tn), jnp.float32)],
        ),
        compiler_params=pltpu.CompilerParams(
            dimension_semantics=("parallel", "parallel", "arbitrary"),
            vmem_limit_bytes=vmem_limit),
        cost_estimate=pl.CostEstimate(
            flops=2 * mp * k_p * n_p,
            transcendentals=0,
            bytes_accessed=bytes_accessed),
    )(x2d, w_kn, b2d)

    return out[:m, :n_out]


def projection_layer(x, params: ProjectionParams):
    """y = x @ W^T + b (nn.Linear forward), applied over the last dim of x."""
    assert x.shape[-1] == params.k_in, "input_dim mismatch with prepared params"
    lead = x.shape[:-1]
    m = 1
    for d in lead:
        m *= d
    out_dtype = x.dtype

    x2d = x.reshape(m, params.k_in)
    if params.compute_dtype is not None:
        x2d = x2d.astype(params.compute_dtype)

    # Clamp tm for small / decode-style M (keep 16-aligned so the block is
    # legal for both f32 and bf16 and stores stay unmasked).
    tm = min(params.tm_max, _round_up(m, 16))
    tn = params.tn
    n_p = params.w_kn.shape[1]
    # v7x has two TensorCores per chip: if M yields a single block, split N so
    # both cores get work along a "parallel" grid axis.
    if (params.gen == "v7x" and _round_up(m, tm) // tm < 2
            and n_p // tn < 2 and tn % 256 == 0):
        tn //= 2

    out2d = _projection_call(
        x2d, params.w_kn, params.b2d,
        n_out=params.n_out, tm=tm, tn=tn, tk=params.tk,
        vmem_limit=params.vmem_limit, out_dtype=out_dtype)
    return out2d.reshape(*lead, params.n_out)


def init_projection_params(key, input_dim, output_dim, dtype=jnp.float32):
    # Deterministic init matching nn.Linear's uniform(-1/sqrt(fan_in), 1/sqrt(fan_in)).
    kw, kb = jax.random.split(key)
    bound = 1.0 / (input_dim ** 0.5)
    weight = jax.random.uniform(kw, (output_dim, input_dim), dtype, -bound, bound)
    bias = jax.random.uniform(kb, (output_dim,), dtype, -bound, bound)
    return weight, bias


if __name__ == "__main__":
    key = jax.random.PRNGKey(0)
    k_x, k_p, k_x2, k_p2 = jax.random.split(key, 4)

    # Small shapes consistent with the module: (batch, seq, input_dim) -> output_dim.
    batch, seq, input_dim, output_dim = 2, 8, 32, 64
    x = jax.random.normal(k_x, (batch, seq, input_dim), dtype=jnp.float32)
    weight, bias = init_projection_params(k_p, input_dim, output_dim)

    params = prepare_projection_params(weight, bias)
    y = projection_layer(x, params)
    jax.block_until_ready(y)

    y_ref = jnp.matmul(x, weight.T, precision=lax.Precision.HIGHEST) + bias
    assert y.shape == (batch, seq, output_dim)
    # f32 matmuls may take a reduced-precision MXU pass path; tolerance is kept
    # loose enough for that while still catching structural bugs.
    assert jnp.allclose(y, y_ref, atol=1e-2, rtol=1e-2), float(jnp.max(jnp.abs(y - y_ref)))

    # Exercise the non-tile-aligned (padded M / K / N) paths too.
    b2, s2, d_in2, d_out2 = 3, 5, 40, 72
    x2 = jax.random.normal(k_x2, (b2, s2, d_in2), dtype=jnp.float32)
    w2, bi2 = init_projection_params(k_p2, d_in2, d_out2)
    params2 = prepare_projection_params(w2, bi2)
    y2 = projection_layer(x2, params2)
    jax.block_until_ready(y2)
    y2_ref = jnp.matmul(x2, w2.T, precision=lax.Precision.HIGHEST) + bi2
    assert y2.shape == (b2, s2, d_out2)
    assert jnp.allclose(y2, y2_ref, atol=1e-2, rtol=1e-2)

    print("KERNEL_OK")
</pallas_src>

<mosaic_0001>
module attributes {stable_mosaic.version = 11 : i64} {
  func.func @_linear_kernel(%arg0: i32, %arg1: i32, %arg2: i32, %arg3: memref<16x128xf32, #tpu.memory_space<vmem>>, %arg4: memref<128x128xf32, #tpu.memory_space<vmem>>, %arg5: memref<1x128xf32, #tpu.memory_space<vmem>>, %arg6: memref<16x128xf32, #tpu.memory_space<vmem>>, %arg7: memref<16x128xf32, #tpu.memory_space<vmem>>) attributes {dimension_semantics = [#tpu.dimension_semantics<parallel>, #tpu.dimension_semantics<parallel>, #tpu.dimension_semantics<arbitrary>], iteration_bounds = array<i64: 1, 1, 1>, scalar_prefetch = 0 : i64, scratch_operands = 1 : i64, tpu.core_type = #tpu.core_type<tc>, window_params = [{transform_indices = @transform_0, window_bounds = array<i64: 16, 128>}, {transform_indices = @transform_1, window_bounds = array<i64: 128, 128>}, {transform_indices = @transform_2, window_bounds = array<i64: 1, 128>}, {transform_indices = @transform_3, window_bounds = array<i64: 16, 128>}]} {
    %c0 = arith.constant 0 : index
    %c0_0 = arith.constant 0 : index
    %0 = vector.load %arg3[%c0, %c0_0] : memref<16x128xf32, #tpu.memory_space<vmem>>, vector<16x128xf32>
    %c0_1 = arith.constant 0 : index
    %c0_2 = arith.constant 0 : index
    %1 = vector.load %arg4[%c0_1, %c0_2] : memref<128x128xf32, #tpu.memory_space<vmem>>, vector<128x128xf32>
    %cst = arith.constant dense<0.000000e+00> : vector<16x128xf32>
    %2 = tpu.matmul %0, %1, %cst {dimension_numbers = #tpu.dot_dimension_numbers<[1], [0], [0], [1], [0, 0, 1, 1], [], []>} : vector<16x128xf32>, vector<128x128xf32>, vector<16x128xf32> -> vector<16x128xf32>
    %c0_i32 = arith.constant 0 : i32
    %3 = arith.cmpi eq, %arg2, %c0_i32 : i32
    %4 = arith.extui %3 : i1 to i32
    %c0_i32_3 = arith.constant 0 : i32
    %5 = arith.cmpi ne, %4, %c0_i32_3 : i32
    scf.if %5 {
      %c0_8 = arith.constant 0 : index
      %c0_9 = arith.constant 0 : index
      %12 = vector.load %arg7[%c0_8, %c0_9] : memref<16x128xf32, #tpu.memory_space<vmem>>, vector<16x128xf32>
      tpu.vector_store %arg7[%c0_8, %c0_9], %2 {strides = array<i32>} : memref<16x128xf32, #tpu.memory_space<vmem>>, vector<16x128xf32>,
    } else {
    }
    %c0_i32_4 = arith.constant 0 : i32
    %6 = arith.cmpi sgt, %arg2, %c0_i32_4 : i32
    %7 = arith.extui %6 : i1 to i32
    %c0_i32_5 = arith.constant 0 : i32
    %8 = arith.cmpi ne, %7, %c0_i32_5 : i32
    scf.if %8 {
      %c0_8 = arith.constant 0 : index
      %c0_9 = arith.constant 0 : index
      %12 = vector.load %arg7[%c0_8, %c0_9] : memref<16x128xf32, #tpu.memory_space<vmem>>, vector<16x128xf32>
      %13 = arith.addf %12, %2 : vector<16x128xf32>
      %c0_10 = arith.constant 0 : index
      %c0_11 = arith.constant 0 : index
      %14 = vector.load %arg7[%c0_10, %c0_11] : memref<16x128xf32, #tpu.memory_space<vmem>>, vector<16x128xf32>
      tpu.vector_store %arg7[%c0_10, %c0_11], %13 {strides = array<i32>} : memref<16x128xf32, #tpu.memory_space<vmem>>, vector<16x128xf32>,
    } else {
    }
    %c0_i32_6 = arith.constant 0 : i32
    %9 = arith.cmpi eq, %arg2, %c0_i32_6 : i32
    %10 = arith.extui %9 : i1 to i32
    %c0_i32_7 = arith.constant 0 : i32
    %11 = arith.cmpi ne, %10, %c0_i32_7 : i32
    scf.if %11 {
      %c0_8 = arith.constant 0 : index
      %c0_9 = arith.constant 0 : index
      %12 = vector.load %arg7[%c0_8, %c0_9] : memref<16x128xf32, #tpu.memory_space<vmem>>, vector<16x128xf32>
      %c0_10 = arith.constant 0 : index
      %c0_11 = arith.constant 0 : index
      %13 = vector.load %arg5[%c0_10, %c0_11] : memref<1x128xf32, #tpu.memory_space<vmem>>, vector<1x128xf32>
      %14 = vector.broadcast %13 : vector<1x128xf32> to vector<16x128xf32>
      %15 = arith.addf %12, %14 : vector<16x128xf32>
      %c0_12 = arith.constant 0 : index
      %c0_13 = arith.constant 0 : index
      %16 = vector.load %arg6[%c0_12, %c0_13] : memref<16x128xf32, #tpu.memory_space<vmem>>, vector<16x128xf32>
      tpu.vector_store %arg6[%c0_12, %c0_13], %15 {strides = array<i32>} : memref<16x128xf32, #tpu.memory_space<vmem>>, vector<16x128xf32>,
    } else {
    }
    return
  }
  func.func @transform_0(%arg0: i32, %arg1: i32, %arg2: i32) -> (i32, i32) {
    %c0_i32 = arith.constant 0 : i32
    return %arg0, %arg2 : i32, i32
  }
  func.func @transform_1(%arg0: i32, %arg1: i32, %arg2: i32) -> (i32, i32) {
    %c0_i32 = arith.constant 0 : i32
    return %arg2, %arg1 : i32, i32
  }
  func.func @transform_2(%arg0: i32, %arg1: i32, %arg2: i32) -> (i32, i32) {
    %c0_i32 = arith.constant 0 : i32
    %c0_i32_0 = arith.constant 0 : i32
    return %c0_i32, %arg1 : i32, i32
  }
  func.func @transform_3(%arg0: i32, %arg1: i32, %arg2: i32) -> (i32, i32) {
    %c0_i32 = arith.constant 0 : i32
    return %arg0, %arg1 : i32, i32
  }
}

</mosaic_0001>

<llo_original>
// kernel: _projection_call.1
$region0: #{_projection_call.1}
  #allocation0 [shape = 'u32[]', space=smem, size = 0x4, offset = 0x4, fixed_abs, tag = 'smem constant byte address 0x4 - core index']
  #allocation1 [shape = 'u32[144,128]{1,0:T(1,128)}', space=vmem, size = 0x12000, scoped, tag = 'internal scratch']
  #allocation2 [shape = 'f32[16,128]{1,0:T(8,128)}', space=vmem, size = 0x2000, scoped, tag = 'scratch operand']
  %s0 = inlined_call_operand.vmem [shape: f32[16,128], index: 0, kind: input, shape index: {}]
  %s1 = inlined_call_operand.hbm [shape: f32[128,128], index: 1, kind: input, shape index: {}]
  %s2 = inlined_call_operand.vmem [shape: f32[1,128], index: 2, kind: input, shape index: {}]
  %s3 = inlined_call_operand.hbm [shape: f32[16,128], index: 3, kind: output, shape index: {}]
  %s4 = sld [smem:[#allocation0]]
  $region38: #{_projection_call.1} parent=0
    _
  %s6 = ssub.s32 1, %s4
  %s7 = scalar_select 0, %s6, %s4
  $region1: #{_projection_call.1} parent=0
    #allocation3 [shape = 'u8[65536]{0}', space=vmem, size = 0x10000, scoped, tag = 'input window, operand 1, single buffered']
    #allocation4 [shape = 's32[1]{0}', space=sflag, size = 0x4, scoped, tag = 'scoped memory for _projection_call.1']
    #allocation5 [shape = 's32[1]{0}', space=sflag, size = 0x4, scoped, tag = 'scoped memory for _projection_call.1']
    #allocation6 [shape = 'u8[8192]{0}', space=vmem, size = 0x2000, scoped, tag = 'output window, operand 0, single buffered']
    %8 = vsyncpa [#allocation4], 0
    %9 = vsyncpa [#allocation5], 0
    // Predicated region
    $region2: #{_projection_call.1} parent=1 // pred_check
      _
    $region3: #{_projection_call.1} parent=1 // pred_check_branch
      %11 = sbr.rel (0) target = $region5
    $region4: #{_projection_call.1} parent=1 // pred_region
      _
    $region5: #{_projection_call.1} parent=1 // pred_fallthru
      _
    // Predicated region
    $region6: #{_projection_call.1} parent=1 // pred_check
      _
    $region7: #{_projection_call.1} parent=1 // pred_check_branch
      %13 = sbr.rel (0) target = $region9
    $region8: #{_projection_call.1} parent=1 // pred_region
      %s15 = ssub.s32 2048, 2048
      %16 = vsyncadd [#allocation4], %s15
      %s17 = sshll.u32 [#allocation3], 4
      %s18 = int_to_ptr.vmem [resolvable:$true] %s17
      %23 = dma.hbm_to_vmem [thread:$0]  %s1, 2048, %s18, [#allocation4], 128, 128, 8
    $region9: #{_projection_call.1} parent=1 // pred_fallthru
      _
    // Predicated region
    $region10: #{_projection_call.1} parent=1 // pred_check
      _
    $region11: #{_projection_call.1} parent=1 // pred_check_branch
      %25 = sbr.rel (0) target = $region13
    $region12: #{_projection_call.1} parent=1 // pred_region
      _
    $region13: #{_projection_call.1} parent=1 // pred_fallthru
      _
    // Predicated region
    $region14: #{_projection_call.1} parent=1 // pred_check
      _
    $region15: #{_projection_call.1} parent=1 // pred_check_branch
      %27 = sbr.rel (0) target = $region17
    $region16: #{_projection_call.1} parent=1 // pred_region
      %28 = dma.done [#allocation4], 2048
    $region17: #{_projection_call.1} parent=1 // pred_fallthru
      _
    %v29 = vld [vmem:[%s0] sm:$0xff]
    %v30 = vld [vmem:[%s0 + $0x8] sm:$0xff]
    %v31 = vld [vmem:[#allocation3] sm:$0xff]
    %v32 = vld [vmem:[#allocation3 + $0x8] sm:$0xff]
    %v33 = vld [vmem:[#allocation3 + $0x10] sm:$0xff]
    %v34 = vld [vmem:[#allocation3 + $0x18] sm:$0xff]
    %v35 = vld [vmem:[#allocation3 + $0x20] sm:$0xff]
    %v36 = vld [vmem:[#allocation3 + $0x28] sm:$0xff]
    %v37 = vld [vmem:[#allocation3 + $0x30] sm:$0xff]
    %v38 = vld [vmem:[#allocation3 + $0x38] sm:$0xff]
    %v39 = vld [vmem:[#allocation3 + $0x40] sm:$0xff]
    %v40 = vld [vmem:[#allocation3 + $0x48] sm:$0xff]
    %v41 = vld [vmem:[#allocation3 + $0x50] sm:$0xff]
    %v42 = vld [vmem:[#allocation3 + $0x58] sm:$0xff]
    %v43 = vld [vmem:[#allocation3 + $0x60] sm:$0xff]
    %v44 = vld [vmem:[#allocation3 + $0x68] sm:$0xff]
    %v45 = vld [vmem:[#allocation3 + $0x70] sm:$0xff]
    %v46 = vld [vmem:[#allocation3 + $0x78] sm:$0xff]
    %47 = vmatprep.subr.mxu0 0.0
    %48 = vmatpush1.msra.mxu0 %v46
    %49 = vmatprep.subr.mxu0 0.0
    %50 = vmatpush1.msra.mxu0 %v45
    %51 = vmatprep.subr.mxu0 0.0
    %52 = vmatpush1.msra.mxu0 %v44
    %53 = vmatprep.subr.mxu0 0.0
    %54 = vmatpush1.msra.mxu0 %v43
    %55 = vmatprep.subr.mxu0 0.0
    %56 = vmatpush1.msra.mxu0 %v42
    %57 = vmatprep.subr.mxu0 0.0
    %58 = vmatpush1.msra.mxu0 %v41
    %59 = vmatprep.subr.mxu0 0.0
    %60 = vmatpush1.msra.mxu0 %v40
    %61 = vmatprep.subr.mxu0 0.0
    %62 = vmatpush1.msra.mxu0 %v39
    %63 = vmatprep.subr.mxu0 0.0
    %64 = vmatpush1.msra.mxu0 %v38
    %65 = vmatprep.subr.mxu0 0.0
    %66 = vmatpush1.msra.mxu0 %v37
    %67 = vmatprep.subr.mxu0 0.0
    %68 = vmatpush1.msra.mxu0 %v36
    %69 = vmatprep.subr.mxu0 0.0
    %70 = vmatpush1.msra.mxu0 %v35
    %71 = vmatprep.subr.mxu0 0.0
    %72 = vmatpush1.msra.mxu0 %v34
    %73 = vmatprep.subr.mxu0 0.0
    %74 = vmatpush1.msra.mxu0 %v33
    %75 = vmatprep.subr.mxu0 0.0
    %76 = vmatpush1.msra.mxu0 %v32
    %77 = vmatprep.subr.mxu0 0.0
    %78 = vmatpush1.msra.mxu0 %v31
    %79 = vmatprep.subr.mxu0 0.0
    %80 = vmatpush2.msra.mxu0 0.0
    %81 = vmatprep.subr.mxu0 0.0
    %82 = vmatpush2.msra.mxu0 0.0
    %83 = vmatprep.subr.mxu0 0.0
    %84 = vmatpush2.msra.mxu0 0.0
    %85 = vmatprep.subr.mxu0 0.0
    %86 = vmatpush2.msra.mxu0 0.0
    %87 = vmatprep.subr.mxu0 0.0
    %88 = vmatpush2.msra.mxu0 0.0
    %89 = vmatprep.subr.mxu0 0.0
    %90 = vmatpush2.msra.mxu0 0.0
    %91 = vmatprep.subr.mxu0 0.0
    %92 = vmatpush2.msra.mxu0 0.0
    %93 = vmatprep.subr.mxu0 0.0
    %94 = vmatpush2.msra.mxu0 0.0
    %95 = vmatprep.subr.mxu0 0.0
    %96 = vmatpush2.msra.mxu0 0.0
    %97 = vmatprep.subr.mxu0 0.0
    %98 = vmatpush2.msra.mxu0 0.0
    %99 = vmatprep.subr.mxu0 0.0
    %100 = vmatpush2.msra.mxu0 0.0
    %101 = vmatprep.subr.mxu0 0.0
    %102 = vmatpush2.msra.mxu0 0.0
    %103 = vmatprep.subr.mxu0 0.0
    %104 = vmatpush2.msra.mxu0 0.0
    %105 = vmatprep.subr.mxu0 0.0
    %106 = vmatpush2.msra.mxu0 0.0
    %107 = vmatprep.subr.mxu0 0.0
    %108 = vmatpush2.msra.mxu0 0.0
    %109 = vmatprep.subr.mxu0 0.0
    %110 = vmatpush2.msra.mxu0 0.0
    %111 = vmatprep.mubr.f32.mxu0 0.0
    %112 = vmatmul.mubr.f32.gmra.mxu0 %v29
    %v113 = vpop.f32.mrf.mxu0
    %v114 = vadd.f32 0.0, %v113
    %v115 = vpop.f32.mrf.mxu0
    %116 = vmatprep.mubr.f32.mxu0 0.0
    %117 = vmatmul.mubr.f32.gmra.mxu0 %v30
    %v118 = vpop.f32.mrf.mxu0
    %v119 = vadd.f32 0.0, %v118
    %v120 = vpop.f32.mrf.mxu0
    %121 = vdwg.mxu0
    %p122 = scmp.eq.s32.totalorder 0, 0
    // Predicated region
    $region18: #{_projection_call.1} parent=1 // pred_check
      %p123 = pneg %p122
    $region19: #{_projection_call.1} parent=1 // pred_check_branch
      %125 = sbr.rel (%p123) target = $region21
    $region20: #{_projection_call.1} parent=1 // pred_region
      %126 = vst [vmem:[#allocation2] sm:$0xff] %v114
      %127 = vst [vmem:[#allocation2 + $0x8] sm:$0xff] %v119
    $region21: #{_projection_call.1} parent=1 // pred_fallthru
      _
    %p128 = scmp.gt.s32.totalorder 0, 0
    // Predicated region
    $region22: #{_projection_call.1} parent=1 // pred_check
      %p129 = pneg %p128
    $region23: #{_projection_call.1} parent=1 // pred_check_branch
      %131 = sbr.rel (%p129) target = $region25
    $region24: #{_projection_call.1} parent=1 // pred_region
      %v132 = vld [vmem:[#allocation2] sm:$0xff]
      %v133 = vld [vmem:[#allocation2 + $0x8] sm:$0xff]
      %v134 = vadd.f32 %v132, %v114
      %v135 = vadd.f32 %v133, %v119
      %136 = vst [vmem:[#allocation2] sm:$0xff] %v134
      %137 = vst [vmem:[#allocation2 + $0x8] sm:$0xff] %v135
    $region25: #{_projection_call.1} parent=1 // pred_fallthru
      _
    // Predicated region
    $region26: #{_projection_call.1} parent=1 // pred_check
      %p138 = pneg %p122
    $region27: #{_projection_call.1} parent=1 // pred_check_branch
      %140 = sbr.rel (%p138) target = $region29
    $region28: #{_projection_call.1} parent=1 // pred_region
      %v141 = vld [vmem:[#allocation2] sm:$0xff]
      %v142 = vld [vmem:[#allocation2 + $0x8] sm:$0xff]
      %v143 = vld [vmem:[%s2] sm:$0x1]
      %v145 = vlaneseq
      %v146 = vshrl.u32 %v145, 7
      %v147 = vsub.s32 0, %v146
      %v148 = vrot.slane %v143, %v147
      %v150 = vadd.f32 %v141, %v148
      %v151 = vadd.f32 %v142, %v148
      %152 = vst [vmem:[#allocation6] sm:$0xff] %v150
      %153 = vst [vmem:[#allocation6 + $0x8] sm:$0xff] %v151
    $region29: #{_projection_call.1} parent=1 // pred_fallthru
      _
    // Predicated region
    $region30: #{_projection_call.1} parent=1 // pred_check
      _
    $region31: #{_projection_call.1} parent=1 // pred_check_branch
      %155 = sbr.rel (0) target = $region33
    $region32: #{_projection_call.1} parent=1 // pred_region
      %s157 = ssub.s32 256, 256
      %158 = vsyncadd [#allocation5], %s157
      %s159 = sshll.u32 [#allocation6], 4
      %s160 = int_to_ptr.vmem [resolvable:$true] %s159
      %165 = dma.vmem_to_hbm [thread:$0]  %s160, 256, %s3, [#allocation5], 128, 128, 8
    $region33: #{_projection_call.1} parent=1 // pred_fallthru
      _
    // Predicated region
    $region34: #{_projection_call.1} parent=1 // pred_check
      _
    $region35: #{_projection_call.1} parent=1 // pred_check_branch
      %167 = sbr.rel (0) target = $region37
    $region36: #{_projection_call.1} parent=1 // pred_region
      %168 = dma.done [#allocation5], 256
    $region37: #{_projection_call.1} parent=1 // pred_fallthru
      _
    %169 = vsyncpa [#allocation4], 1
    %170 = vsyncpa [#allocation5], 1

</llo_original>
